<compile_context>
chip_gen: v6e
topology: v6e:2x2x1
jax: 0.10.0
libtpu: 0.0.40
codegen_flags: <defaults>
</compile_context>

<pallas_src>
import functools
import math

import jax
import jax.numpy as jnp
from jax.experimental import pallas as pl
from jax.experimental.pallas import tpu as pltpu

_LANES = 128                       # lane-dense last block dim (one vreg width)
_BLOCK_BYTES = 4 * 1024 * 1024     # target bytes per block buffer (~4 MiB)
_VMEM_LIMIT = 48 * 1024 * 1024     # explicit scoped-VMEM ceiling (v7x-safe)


def _scale_kernel(scale_ref, x_ref, o_ref):
    # scale_ref: (1, 1) f32 in SMEM holding clip(exp(log_logit_scale), max).
    # x_ref / o_ref: (tile_rows, _LANES) lane-dense VMEM tiles.
    o_ref[...] = (x_ref[...] * scale_ref[0, 0]).astype(o_ref.dtype)


def _scale_2d(x2d, scale, tile_rows):
    R, L = x2d.shape
    grid = (pl.cdiv(R, tile_rows),)
    return pl.pallas_call(
        _scale_kernel,
        out_shape=jax.ShapeDtypeStruct((R, L), x2d.dtype),
        grid_spec=pltpu.PrefetchScalarGridSpec(
            num_scalar_prefetch=0,
            grid=grid,
            in_specs=[
                pl.BlockSpec(memory_space=pltpu.MemorySpace.SMEM),   # scalar scale
                pl.BlockSpec((tile_rows, L), lambda i: (i, 0)),
            ],
            out_specs=pl.BlockSpec((tile_rows, L), lambda i: (i, 0)),
        ),
        compiler_params=pltpu.CompilerParams(
            dimension_semantics=("parallel",),
            vmem_limit_bytes=_VMEM_LIMIT,
        ),
    )(scale, x2d)


@functools.partial(jax.jit, static_argnames=("max_logit_scale",))
def learnable_logit_scaling(x, log_logit_scale, max_logit_scale: float = 100.0):
    """out = clip(exp(log_logit_scale), max=max_logit_scale) * x (any shape/dtype)."""
    # Scalar exp + clip: computed once here in f32 (one scalar op), then the
    # tensor multiply runs in the Pallas kernel.
    scale = jnp.minimum(jnp.exp(log_logit_scale.astype(jnp.float32)),
                        jnp.float32(max_logit_scale))
    scale = scale.reshape(1, 1)

    orig_shape = x.shape
    n = x.size
    itemsize = jnp.dtype(x.dtype).itemsize
    pack = max(8, 32 // itemsize)       # sublane packing: 8 f32 / 16 bf16 / 32 int8

    # Contiguous flatten -> (rows, 128): pure metadata reshape, no transpose.
    flat = x.reshape(-1)
    pad = (-n) % _LANES
    if pad:
        # Ragged path only: pad to a whole number of 128-lane rows.
        flat = jnp.pad(flat, (0, pad))
    r = flat.size // _LANES
    x2d = flat.reshape(r, _LANES)

    # Tile rows from a VMEM byte budget, rounded to the sublane packing.
    tile_rows = _BLOCK_BYTES // (_LANES * itemsize)
    tile_rows = max(pack, (tile_rows // pack) * pack)
    if tile_rows >= r:
        tile_rows = r                   # single full-extent block (always legal)

    y2d = _scale_2d(x2d, scale, tile_rows)

    y = y2d.reshape(-1)
    if pad:
        y = y[:n]
    return y.reshape(orig_shape)


if __name__ == "__main__":
    key = jax.random.PRNGKey(0)
    max_logit_scale = 100.0
    log_logit_scale = jnp.array(math.log(1.0 / 0.07), dtype=jnp.float32)

    # Main check: small activation-shaped input.
    x = jax.random.normal(key, (2, 4, 16, 16), dtype=jnp.float32)
    out = learnable_logit_scaling(x, log_logit_scale, max_logit_scale=max_logit_scale)
    out = jax.block_until_ready(out)

    ref = jnp.minimum(jnp.exp(log_logit_scale), max_logit_scale) * x
    assert out.shape == x.shape and out.dtype == x.dtype
    assert jnp.max(jnp.abs(out - ref)) < 1e-5

    # Ragged-size check (exercises the padding path / partial tiles).
    x2 = jax.random.normal(jax.random.PRNGKey(1), (3, 5, 7), dtype=jnp.float32)
    out2 = jax.block_until_ready(
        learnable_logit_scaling(x2, log_logit_scale, max_logit_scale=max_logit_scale)
    )
    ref2 = jnp.minimum(jnp.exp(log_logit_scale), max_logit_scale) * x2
    assert out2.shape == x2.shape
    assert jnp.max(jnp.abs(out2 - ref2)) < 1e-5

    # bf16 check (exercises sublane packing / dtype cast path).
    x3 = jax.random.normal(jax.random.PRNGKey(2), (2, 8, 32), dtype=jnp.bfloat16)
    out3 = jax.block_until_ready(
        learnable_logit_scaling(x3, log_logit_scale, max_logit_scale=max_logit_scale)
    )
    ref3 = (jnp.minimum(jnp.exp(log_logit_scale), max_logit_scale)
            * x3.astype(jnp.float32)).astype(jnp.bfloat16)
    assert out3.shape == x3.shape and out3.dtype == x3.dtype
    assert jnp.max(jnp.abs(out3.astype(jnp.float32) - ref3.astype(jnp.float32))) < 1e-1

    print("KERNEL_OK")
</pallas_src>

<mosaic_0001>
module attributes {stable_mosaic.version = 11 : i64} {
  func.func @_scale_kernel(%arg0: i32, %arg1: memref<1x1xf32, #tpu.memory_space<smem>>, %arg2: memref<16x128xf32, #tpu.memory_space<vmem>>, %arg3: memref<16x128xf32, #tpu.memory_space<vmem>>) attributes {dimension_semantics = [#tpu.dimension_semantics<parallel>], iteration_bounds = array<i64: 1>, scalar_prefetch = 0 : i64, scratch_operands = 0 : i64, tpu.core_type = #tpu.core_type<tc>, window_params = [{transform_indices = @transform_0, window_bounds = array<i64: 1, 1>}, {transform_indices = @transform_1, window_bounds = array<i64: 16, 128>}, {transform_indices = @transform_2, window_bounds = array<i64: 16, 128>}]} {
    %c0 = arith.constant 0 : index
    %c0_0 = arith.constant 0 : index
    %0 = vector.load %arg2[%c0, %c0_0] : memref<16x128xf32, #tpu.memory_space<vmem>>, vector<16x128xf32>
    %c0_1 = arith.constant 0 : index
    %c0_2 = arith.constant 0 : index
    %1 = memref.load %arg1[%c0_1, %c0_2] : memref<1x1xf32, #tpu.memory_space<smem>>
    %2 = vector.broadcast %1 : f32 to vector<16x128xf32>
    %3 = arith.mulf %0, %2 : vector<16x128xf32>
    %c0_3 = arith.constant 0 : index
    %c0_4 = arith.constant 0 : index
    %4 = vector.load %arg3[%c0_3, %c0_4] : memref<16x128xf32, #tpu.memory_space<vmem>>, vector<16x128xf32>
    tpu.vector_store %arg3[%c0_3, %c0_4], %3 {strides = array<i32>} : memref<16x128xf32, #tpu.memory_space<vmem>>, vector<16x128xf32>,
    return
  }
  func.func @transform_0(%arg0: i32) -> (i32, i32) {
    %c0_i32 = arith.constant 0 : i32
    %c0_i32_0 = arith.constant 0 : i32
    %c0_i32_1 = arith.constant 0 : i32
    return %c0_i32, %c0_i32_0 : i32, i32
  }
  func.func @transform_1(%arg0: i32) -> (i32, i32) {
    %c0_i32 = arith.constant 0 : i32
    %c0_i32_0 = arith.constant 0 : i32
    return %arg0, %c0_i32 : i32, i32
  }
  func.func @transform_2(%arg0: i32) -> (i32, i32) {
    %c0_i32 = arith.constant 0 : i32
    %c0_i32_0 = arith.constant 0 : i32
    return %arg0, %c0_i32 : i32, i32
  }
}

</mosaic_0001>

<llo_original>
// kernel: learnable_logit_scaling.1
$region0: #{learnable_logit_scaling.1}
  #allocation0 [shape = 'u32[]', space=smem, size = 0x4, offset = 0x4, fixed_abs, tag = 'smem constant byte address 0x4 - core index']
  #allocation1 [shape = 'u32[144,128]{1,0:T(1,128)}', space=vmem, size = 0x12000, scoped, tag = 'internal scratch']
  #allocation2 [shape = 'f32[1,1]{1,0:T(1,128)S(6)}', space=smem, size = 0x200, scoped, tag = 'scoped memory for learnable_logit_scaling.1']
  %s0 = inlined_call_operand.<no memory space> [shape: f32[1,1], index: 0, kind: input, shape index: {}]
  %s1 = inlined_call_operand.vmem [shape: f32[16,128], index: 1, kind: input, shape index: {}]
  %s2 = inlined_call_operand.vmem [shape: f32[16,128], index: 2, kind: output, shape index: {}]
  %s3 = sld [smem:[#allocation0]]
  $region18: #{learnable_logit_scaling.1} parent=0
    _
  %s5 = ssub.s32 1, %s3
  %s6 = scalar_select 0, %s5, %s3
  %7 = sst [smem:[#allocation2]] %s0
  // Predicated region
  $region2: #{learnable_logit_scaling.1} parent=0 // pred_check
    _
  $region3: #{learnable_logit_scaling.1} parent=0 // pred_check_branch
    %9 = sbr.rel (0) target = $region5
  $region4: #{learnable_logit_scaling.1} parent=0 // pred_region
    _
  $region5: #{learnable_logit_scaling.1} parent=0 // pred_fallthru
    _
  // Predicated region
  $region6: #{learnable_logit_scaling.1} parent=0 // pred_check
    _
  $region7: #{learnable_logit_scaling.1} parent=0 // pred_check_branch
    %11 = sbr.rel (0) target = $region9
  $region8: #{learnable_logit_scaling.1} parent=0 // pred_region
    _
  $region9: #{learnable_logit_scaling.1} parent=0 // pred_fallthru
    _
  %v12 = vld [vmem:[%s1] sm:$0xff]
  %v13 = vld [vmem:[%s1 + $0x8] sm:$0xff]
  %s14 = sld [smem:[#allocation2]]
  %v15 = vstv %s14
  %v16 = vmul.f32 %v12, %v15
  %v17 = vmul.f32 %v13, %v15
  %18 = vst [vmem:[%s2] sm:$0xff] %v16
  %19 = vst [vmem:[%s2 + $0x8] sm:$0xff] %v17
  // Predicated region
  $region10: #{learnable_logit_scaling.1} parent=0 // pred_check
    _
  $region11: #{learnable_logit_scaling.1} parent=0 // pred_check_branch
    %21 = sbr.rel (0) target = $region13
  $region12: #{learnable_logit_scaling.1} parent=0 // pred_region
    _
  $region13: #{learnable_logit_scaling.1} parent=0 // pred_fallthru
    _
  // Predicated region
  $region14: #{learnable_logit_scaling.1} parent=0 // pred_check
    _
  $region15: #{learnable_logit_scaling.1} parent=0 // pred_check_branch
    %23 = sbr.rel (0) target = $region17
  $region16: #{learnable_logit_scaling.1} parent=0 // pred_region
    _
  $region17: #{learnable_logit_scaling.1} parent=0 // pred_fallthru
    _

</llo_original>
